<compile_context>
chip_gen: v7x
topology: tpu7x:2x2x1
jax: 0.10.0
libtpu: 0.0.40
codegen_flags: <defaults>
</compile_context>

<pallas_src>
import jax
import jax.numpy as jnp
from jax.experimental import pallas as pl
from jax.experimental.pallas import tpu as pltpu


# -----------------------------------------------------------------------------
# Fused per-batch-element kernel (grid=(N,), one image per step):
#   pt_ref  : (9*Cin, H*W)  bf16  transposed im2col patches for this image
#   cwt_ref : (Cmid, 9*Cin) bf16  transposed conv weights (grid-invariant)
#   cbt_ref : (Cmid, 1)     f32   conv bias (column vector)
#   fw_ref  : (Cmid, NC)    f32   classifier weights
#   fb_ref  : (1, NC)       f32   classifier bias
#   o_ref   : (1, 1, NC)    f32   softmax probabilities for this image
# -----------------------------------------------------------------------------
def fused_classifier_kernel(pt_ref, cwt_ref, cbt_ref, fw_ref, fb_ref, o_ref):
    # 3x3 conv as ONE MXU matmul, transposed so the big accumulator is
    # lane-dense: (Cmid, 9Cin) @ (9Cin, HW) -> (Cmid, HW) f32.
    acc_t = jnp.dot(cwt_ref[...], pt_ref[...],
                    preferred_element_type=jnp.float32)
    acc_t = jnp.maximum(acc_t + cbt_ref[...], 0.0)          # bias + ReLU

    # Global average pool: f32 lane (XLU) reduction, exact 1/(H*W) scale.
    inv_hw = 1.0 / acc_t.shape[-1]
    pooled_t = jnp.sum(acc_t, axis=-1, keepdims=True) * inv_hw   # (Cmid, 1)

    # Classifier head on the VPU (tiny Cmid x NC), all f32:
    # (Cmid,1) * (Cmid,NC) -> sublane-reduce -> (1, NC).
    logits = jnp.sum(pooled_t * fw_ref[...], axis=0, keepdims=True) \
        + fb_ref[...]

    # Numerically-stable, exactly-normalized softmax over the class axis.
    m = jnp.max(logits, axis=-1, keepdims=True)
    e = jnp.exp(logits - m)
    probs = e / jnp.sum(e, axis=-1, keepdims=True)
    o_ref[0] = probs


# -----------------------------------------------------------------------------
# Wrapper
# -----------------------------------------------------------------------------
def model_forward(x_nchw, params):
    """x_nchw: (N, Cin, H, W) float32  ->  (N, NumClasses) float32 softmax."""
    conv_w, conv_b, fc_w, fc_b = params
    N, Cin, H, W = x_nchw.shape
    Cmid = conv_w.shape[-1]
    NC = fc_w.shape[-1]
    HW = H * W
    K9 = 9 * Cin

    # NCHW -> NHWC, cast to bf16 BEFORE im2col so the patch slab is only ever
    # materialized/read at half width, then zero-pad and build the slab.
    x = jnp.transpose(x_nchw, (0, 2, 3, 1)).astype(jnp.bfloat16)
    xp = jnp.pad(x, ((0, 0), (1, 1), (1, 1), (0, 0)))
    patches = jnp.concatenate(
        [xp[:, kh:kh + H, kw:kw + W, :] for kh in range(3) for kw in range(3)],
        axis=-1)                                            # (N, H, W, 9*Cin)
    # Transposed lane-dense slab: (9*Cin, N*HW); column block b = image b.
    patches_t = jnp.transpose(patches.reshape(N, HW, K9),
                              (2, 0, 1)).reshape(K9, N * HW)

    # Conv weights flattened (kh, kw, cin) to match the slab, then transposed.
    cw_t = jnp.transpose(conv_w.reshape(K9, Cmid)).astype(jnp.bfloat16)
    cb_t = conv_b.reshape(Cmid, 1)                          # f32 column bias

    probs = pl.pallas_call(
        fused_classifier_kernel,
        out_shape=jax.ShapeDtypeStruct((N, 1, NC), jnp.float32),
        grid=(N,),
        in_specs=[
            pl.BlockSpec((K9, HW), lambda b: (0, b)),       # per-image patches
            pl.BlockSpec((Cmid, K9), lambda b: (0, 0)),     # grid-invariant
            pl.BlockSpec((Cmid, 1), lambda b: (0, 0)),
            pl.BlockSpec((Cmid, NC), lambda b: (0, 0)),
            pl.BlockSpec((1, NC), lambda b: (0, 0)),
        ],
        out_specs=pl.BlockSpec((1, 1, NC), lambda b: (b, 0, 0)),
        compiler_params=pltpu.CompilerParams(
            dimension_semantics=("parallel",),              # shards over TCs
            vmem_limit_bytes=32 * 1024 * 1024),
    )(patches_t, cw_t, cb_t, fc_w, fc_b)
    return probs.reshape(N, NC)


# -----------------------------------------------------------------------------
# Pure-JAX reference (for correctness check)
# -----------------------------------------------------------------------------
def reference_forward(x_nchw, params):
    conv_w, conv_b, fc_w, fc_b = params
    x = jnp.transpose(x_nchw, (0, 2, 3, 1))
    y = jax.lax.conv_general_dilated(
        x, conv_w, window_strides=(1, 1), padding="SAME",
        dimension_numbers=("NHWC", "HWIO", "NHWC"))
    y = jnp.maximum(y + conv_b.reshape(1, 1, 1, -1), 0.0)
    feats = jnp.mean(y, axis=(1, 2))
    logits = feats @ fc_w + fc_b
    return jax.nn.softmax(logits, axis=-1)


def init_params(key, Cin, Cmid, num_classes):
    k1, k2, k3, k4 = jax.random.split(key, 4)
    conv_w = jax.random.normal(k1, (3, 3, Cin, Cmid), jnp.float32) * 0.1
    conv_b = jax.random.normal(k2, (1, Cmid), jnp.float32) * 0.1
    fc_w = jax.random.normal(k3, (Cmid, num_classes), jnp.float32) * 0.1
    fc_b = jax.random.normal(k4, (1, num_classes), jnp.float32) * 0.1
    return conv_w, conv_b, fc_w, fc_b


if __name__ == "__main__":
    key = jax.random.PRNGKey(0)
    kx, kp = jax.random.split(key)

    N, Cin, H, W = 2, 4, 16, 16
    Cmid, num_classes = 8, 32

    x = jax.random.normal(kx, (N, Cin, H, W), jnp.float32)
    params = init_params(kp, Cin, Cmid, num_classes)

    out = jax.jit(model_forward)(x, params)
    out = jax.block_until_ready(out)

    ref = reference_forward(x, params)

    assert out.shape == (N, num_classes)
    assert jnp.allclose(jnp.sum(out, axis=-1), 1.0, atol=1e-5)
    assert jnp.allclose(out, ref, atol=5e-3)
    print("KERNEL_OK")
</pallas_src>

<mosaic_0001>
module attributes {stable_mosaic.version = 11 : i64} {
  func.func @fused_classifier_kernel(%arg0: i32, %arg1: memref<36x256xbf16, #tpu.memory_space<vmem>>, %arg2: memref<8x36xbf16, #tpu.memory_space<vmem>>, %arg3: memref<8x1xf32, #tpu.memory_space<vmem>>, %arg4: memref<8x32xf32, #tpu.memory_space<vmem>>, %arg5: memref<1x32xf32, #tpu.memory_space<vmem>>, %arg6: memref<1x1x32xf32, #tpu.memory_space<vmem>>) attributes {dimension_semantics = [#tpu.dimension_semantics<parallel>], iteration_bounds = array<i64: 2>, scalar_prefetch = 0 : i64, scratch_operands = 0 : i64, tpu.core_type = #tpu.core_type<tc>, window_params = [{transform_indices = @transform_0, window_bounds = array<i64: 36, 256>}, {pipeline_mode = #tpu.pipeline_mode<synchronous>, transform_indices = @transform_1, window_bounds = array<i64: 8, 36>}, {pipeline_mode = #tpu.pipeline_mode<synchronous>, transform_indices = @transform_2, window_bounds = array<i64: 8, 1>}, {pipeline_mode = #tpu.pipeline_mode<synchronous>, transform_indices = @transform_3, window_bounds = array<i64: 8, 32>}, {pipeline_mode = #tpu.pipeline_mode<synchronous>, transform_indices = @transform_4, window_bounds = array<i64: 1, 32>}, {transform_indices = @transform_5, window_bounds = array<i64: 1, 1, 32>}]} {
    %c0 = arith.constant 0 : index
    %c0_0 = arith.constant 0 : index
    %0 = vector.load %arg2[%c0, %c0_0] : memref<8x36xbf16, #tpu.memory_space<vmem>>, vector<8x36xbf16>
    %c0_1 = arith.constant 0 : index
    %c0_2 = arith.constant 0 : index
    %1 = vector.load %arg1[%c0_1, %c0_2] : memref<36x256xbf16, #tpu.memory_space<vmem>>, vector<36x256xbf16>
    %cst = arith.constant dense<0.000000e+00> : vector<8x256xf32>
    %2 = tpu.matmul %0, %1, %cst {dimension_numbers = #tpu.dot_dimension_numbers<[1], [0], [0], [1], [0, 0, 1, 1], [], []>} : vector<8x36xbf16>, vector<36x256xbf16>, vector<8x256xf32> -> vector<8x256xf32>
    %c0_3 = arith.constant 0 : index
    %c0_4 = arith.constant 0 : index
    %3 = vector.load %arg3[%c0_3, %c0_4] : memref<8x1xf32, #tpu.memory_space<vmem>>, vector<8x1xf32>
    %4 = vector.broadcast %3 : vector<8x1xf32> to vector<8x256xf32>
    %5 = arith.addf %2, %4 : vector<8x256xf32>
    %cst_5 = arith.constant 0.000000e+00 : f32
    %6 = vector.broadcast %cst_5 : f32 to vector<8x256xf32>
    %7 = arith.maximumf %5, %6 : vector<8x256xf32>
    %cst_6 = arith.constant dense<0.000000e+00> : vector<8xf32>
    %8 = vector.multi_reduction <add>, %7, %cst_6 [1] : vector<8x256xf32> to vector<8xf32>
    %9 = vector.shape_cast %8 : vector<8xf32> to vector<8x1xf32>
    %cst_7 = arith.constant 3.906250e-03 : f32
    %10 = vector.broadcast %cst_7 : f32 to vector<8x1xf32>
    %11 = arith.mulf %9, %10 : vector<8x1xf32>
    %c0_8 = arith.constant 0 : index
    %c0_9 = arith.constant 0 : index
    %12 = vector.load %arg4[%c0_8, %c0_9] : memref<8x32xf32, #tpu.memory_space<vmem>>, vector<8x32xf32>
    %13 = vector.broadcast %11 : vector<8x1xf32> to vector<8x32xf32>
    %14 = arith.mulf %13, %12 : vector<8x32xf32>
    %cst_10 = arith.constant dense<0.000000e+00> : vector<32xf32>
    %15 = vector.multi_reduction <add>, %14, %cst_10 [0] : vector<8x32xf32> to vector<32xf32>
    %16 = vector.shape_cast %15 : vector<32xf32> to vector<1x32xf32>
    %c0_11 = arith.constant 0 : index
    %c0_12 = arith.constant 0 : index
    %17 = vector.load %arg5[%c0_11, %c0_12] : memref<1x32xf32, #tpu.memory_space<vmem>>, vector<1x32xf32>
    %18 = arith.addf %16, %17 : vector<1x32xf32>
    %cst_13 = arith.constant dense<0xFF800000> : vector<1xf32>
    %19 = vector.multi_reduction <maximumf>, %18, %cst_13 [1] : vector<1x32xf32> to vector<1xf32>
    %20 = vector.shape_cast %19 : vector<1xf32> to vector<1x1xf32>
    %21 = vector.broadcast %20 : vector<1x1xf32> to vector<1x32xf32>
    %22 = arith.subf %18, %21 : vector<1x32xf32>
    %23 = math.exp %22 : vector<1x32xf32>
    %cst_14 = arith.constant dense<0.000000e+00> : vector<1xf32>
    %24 = vector.multi_reduction <add>, %23, %cst_14 [1] : vector<1x32xf32> to vector<1xf32>
    %25 = vector.shape_cast %24 : vector<1xf32> to vector<1x1xf32>
    %26 = vector.broadcast %25 : vector<1x1xf32> to vector<1x32xf32>
    %27 = arith.divf %23, %26 : vector<1x32xf32>
    %c0_15 = arith.constant 0 : index
    %c0_16 = arith.constant 0 : index
    %c0_17 = arith.constant 0 : index
    %28 = vector.load %arg6[%c0_15, %c0_16, %c0_17] : memref<1x1x32xf32, #tpu.memory_space<vmem>>, vector<1x1x32xf32>
    %29 = vector.shape_cast %28 : vector<1x1x32xf32> to vector<1x32xf32>
    %30 = vector.shape_cast %27 : vector<1x32xf32> to vector<1x1x32xf32>
    tpu.vector_store %arg6[%c0_15, %c0_16, %c0_17], %30 {strides = array<i32>} : memref<1x1x32xf32, #tpu.memory_space<vmem>>, vector<1x1x32xf32>,
    return
  }
  func.func @transform_0(%arg0: i32) -> (i32, i32) {
    %c0_i32 = arith.constant 0 : i32
    %c0_i32_0 = arith.constant 0 : i32
    return %c0_i32, %arg0 : i32, i32
  }
  func.func @transform_1(%arg0: i32) -> (i32, i32) {
    %c0_i32 = arith.constant 0 : i32
    %c0_i32_0 = arith.constant 0 : i32
    %c0_i32_1 = arith.constant 0 : i32
    return %c0_i32, %c0_i32_0 : i32, i32
  }
  func.func @transform_2(%arg0: i32) -> (i32, i32) {
    %c0_i32 = arith.constant 0 : i32
    %c0_i32_0 = arith.constant 0 : i32
    %c0_i32_1 = arith.constant 0 : i32
    return %c0_i32, %c0_i32_0 : i32, i32
  }
  func.func @transform_3(%arg0: i32) -> (i32, i32) {
    %c0_i32 = arith.constant 0 : i32
    %c0_i32_0 = arith.constant 0 : i32
    %c0_i32_1 = arith.constant 0 : i32
    return %c0_i32, %c0_i32_0 : i32, i32
  }
  func.func @transform_4(%arg0: i32) -> (i32, i32) {
    %c0_i32 = arith.constant 0 : i32
    %c0_i32_0 = arith.constant 0 : i32
    %c0_i32_1 = arith.constant 0 : i32
    return %c0_i32, %c0_i32_0 : i32, i32
  }
  func.func @transform_5(%arg0: i32) -> (i32, i32, i32) {
    %c0_i32 = arith.constant 0 : i32
    %c0_i32_0 = arith.constant 0 : i32
    %c0_i32_1 = arith.constant 0 : i32
    return %arg0, %c0_i32, %c0_i32_0 : i32, i32, i32
  }
}

</mosaic_0001>

<llo_original>
// kernel: model_forward.1
$region0: #{model_forward.1}
  #allocation0 [shape = 'u32[]', space=smem, size = 0x4, offset = 0x4, fixed_abs, tag = 'smem constant byte address 0x4 - core index']
  #allocation1 [shape = 'u32[144,128]{1,0:T(1,128)}', space=vmem, size = 0x12000, scoped, tag = 'internal scratch']
  %s0 = inlined_call_operand.vmem [shape: bf16[36,512], index: 0, kind: input, shape index: {}]
  %s1 = inlined_call_operand.vmem [shape: bf16[8,36], index: 1, kind: input, shape index: {}]
  %s2 = inlined_call_operand.vmem [shape: f32[8,1], index: 2, kind: input, shape index: {}]
  %s3 = inlined_call_operand.vmem [shape: f32[8,32], index: 3, kind: input, shape index: {}]
  %s4 = inlined_call_operand.vmem [shape: f32[1,32], index: 4, kind: input, shape index: {}]
  %s5 = inlined_call_operand.hbm [shape: f32[2,1,32], index: 5, kind: output, shape index: {}]
  %s6 = sld [smem:[#allocation0]]
  $region91: #{model_forward.1} parent=0
    _
  %s8 = ssub.s32 1, %s6
  %s9 = scalar_select 0, %s8, %s6
  $region1: #{model_forward.1} parent=0
    #allocation2 [shape = 'u8[40960]{0}', space=vmem, size = 0xa000, scoped, tag = 'input window, operand 0']
    #allocation3 [shape = 'u8[1024]{0}', space=vmem, size = 0x400, scoped, tag = 'output window, operand 0']
    #allocation4 [shape = 's32[2]{0}', space=sflag, size = 0x8, scoped, tag = 'scoped memory for model_forward.1']
    %10 = vsyncpa [#allocation4], 0
    %s11 = scalar_lea.sflag [#allocation4], 1
    %12 = vsyncpa %s11, 0
    loop: start=0, step=1, limit=4
    $region2: #{model_forward.1} parent=1 // loop_pre_header
      _
    $region3: #{model_forward.1} parent=1 // loop_header
      %s14 = sphi 0, %s18
      %p15 = scmp.ge.s32.totalorder %s14, 4
      %s24 = sphi 0, %s26
      %s27 = sphi 0, %s24
      %s28 = sphi 0, %s27
      %s44 = sphi 0, %s28
      %s48 = sphi 0, %s48
      %s50 = sphi 0, %s48
      %s51 = sphi 0, %s50
      %s65 = sphi 0, %s51
      %s69 = sphi 0, %s69
      %s71 = sphi 0, %s69
      %s72 = sphi 0, %s71
      %s86 = sphi 0, %s72
      %s90 = sphi 0, %s90
      %s92 = sphi 0, %s90
      %s93 = sphi 0, %s92
      %s107 = sphi 0, %s93
      %s111 = sphi 0, %s111
      %s113 = sphi 0, %s111
      %s114 = sphi 0, %s113
      %s128 = sphi 0, %s114
      %s134 = sphi 0, %s136
      %s137 = sphi 0, %s134
      %s138 = sphi 0, %s137
      %s154 = sphi 0, %s138
    $region4: #{model_forward.1} parent=1 // loop_header_branch
      %17 = sbr.rel (%p15) target = $region8
    $region5: #{model_forward.1} parent=1 // loop_body
      %s19 = ssub.s32 %s14, 1
      %s20 = ssub.s32 %s14, 2
      %s21 = sadd.s32 %s14, 1
      %s22 = ssub.s32 %s14, %s21
      %p23 = scmp.eq.s32.totalorder %s22, 0
      %s25 = sadd.s32 %s24, 1
      %s26 = scalar_select %p23, %s24, %s25
      %p29 = pneg %p23
      %p30 = scmp.eq.s32.totalorder %s14, 1
      %p31 = por %p29, %p30
      %p32 = scmp.ne.s32.totalorder %s24, %s27
      %p33 = scmp.eq.s32.totalorder %s14, 0
      %p34 = por %p32, %p33
      %p35 = scmp.ne.s32.totalorder %s24, %s27
      %p36 = scmp.eq.s32.totalorder %s19, 1
      %p37 = por %p35, %p36
      %p38 = scmp.ne.s32.totalorder %s27, %s28
      %p39 = scmp.eq.s32.totalorder %s19, 0
      %p40 = por %p38, %p39
      %p41 = scmp.ne.s32.totalorder %s27, %s28
      %p42 = scmp.eq.s32.totalorder %s20, 1
      %p43 = por %p41, %p42
      %p45 = scmp.ne.s32.totalorder %s28, %s44
      %p46 = scmp.eq.s32.totalorder %s20, 0
      %p47 = por %p45, %p46
      %s49 = sadd.s32 %s48, 1
      %p52 = scmp.eq.s32.totalorder %s14, 1
      %p53 = scmp.ne.s32.totalorder %s48, %s50
      %p54 = scmp.eq.s32.totalorder %s14, 0
      %p55 = por %p53, %p54
      %p56 = scmp.ne.s32.totalorder %s48, %s50
      %p57 = scmp.eq.s32.totalorder %s19, 1
      %p58 = por %p56, %p57
      %p59 = scmp.ne.s32.totalorder %s50, %s51
      %p60 = scmp.eq.s32.totalorder %s19, 0
      %p61 = por %p59, %p60
      %p62 = scmp.ne.s32.totalorder %s50, %s51
      %p63 = scmp.eq.s32.totalorder %s20, 1
      %p64 = por %p62, %p63
      %p66 = scmp.ne.s32.totalorder %s51, %s65
      %p67 = scmp.eq.s32.totalorder %s20, 0
      %p68 = por %p66, %p67
      %s70 = sadd.s32 %s69, 1
      %p73 = scmp.eq.s32.totalorder %s14, 1
      %p74 = scmp.ne.s32.totalorder %s69, %s71
      %p75 = scmp.eq.s32.totalorder %s14, 0
      %p76 = por %p74, %p75
      %p77 = scmp.ne.s32.totalorder %s69, %s71
      %p78 = scmp.eq.s32.totalorder %s19, 1
      %p79 = por %p77, %p78
      %p80 = scmp.ne.s32.totalorder %s71, %s72
      %p81 = scmp.eq.s32.totalorder %s19, 0
      %p82 = por %p80, %p81
      %p83 = scmp.ne.s32.totalorder %s71, %s72
      %p84 = scmp.eq.s32.totalorder %s20, 1
      %p85 = por %p83, %p84
      %p87 = scmp.ne.s32.totalorder %s72, %s86
      %p88 = scmp.eq.s32.totalorder %s20, 0
      %p89 = por %p87, %p88
      %s91 = sadd.s32 %s90, 1
      %p94 = scmp.eq.s32.totalorder %s14, 1
      %p95 = scmp.ne.s32.totalorder %s90, %s92
      %p96 = scmp.eq.s32.totalorder %s14, 0
      %p97 = por %p95, %p96
      %p98 = scmp.ne.s32.totalorder %s90, %s92
      %p99 = scmp.eq.s32.totalorder %s19, 1
      %p100 = por %p98, %p99
      %p101 = scmp.ne.s32.totalorder %s92, %s93
      %p102 = scmp.eq.s32.totalorder %s19, 0
      %p103 = por %p101, %p102
      %p104 = scmp.ne.s32.totalorder %s92, %s93
      %p105 = scmp.eq.s32.totalorder %s20, 1
      %p106 = por %p104, %p105
      %p108 = scmp.ne.s32.totalorder %s93, %s107
      %p109 = scmp.eq.s32.totalorder %s20, 0
      %p110 = por %p108, %p109
      %s112 = sadd.s32 %s111, 1
      %p115 = scmp.eq.s32.totalorder %s14, 1
      %p116 = scmp.ne.s32.totalorder %s111, %s113
      %p117 = scmp.eq.s32.totalorder %s14, 0
      %p118 = por %p116, %p117
      %p119 = scmp.ne.s32.totalorder %s111, %s113
      %p120 = scmp.eq.s32.totalorder %s19, 1
      %p121 = por %p119, %p120
      %p122 = scmp.ne.s32.totalorder %s113, %s114
      %p123 = scmp.eq.s32.totalorder %s19, 0
      %p124 = por %p122, %p123
      %p125 = scmp.ne.s32.totalorder %s113, %s114
      %p126 = scmp.eq.s32.totalorder %s20, 1
      %p127 = por %p125, %p126
      %p129 = scmp.ne.s32.totalorder %s114, %s128
      %p130 = scmp.eq.s32.totalorder %s20, 0
      %p131 = por %p129, %p130
      %s132 = ssub.s32 %s14, %s21
      %p133 = scmp.eq.s32.totalorder %s132, 0
      %s135 = sadd.s32 %s134, 1
      %s136 = scalar_select %p133, %s134, %s135
      %p139 = pneg %p133
      %p140 = scmp.eq.s32.totalorder %s14, 1
      %p141 = por %p139, %p140
      %p142 = scmp.ne.s32.totalorder %s134, %s137
      %p143 = scmp.eq.s32.totalorder %s14, 0
      %p144 = por %p142, %p143
      %p145 = scmp.ne.s32.totalorder %s134, %s137
      %p146 = scmp.eq.s32.totalorder %s19, 1
      %p147 = por %p145, %p146
      %p148 = scmp.ne.s32.totalorder %s137, %s138
      %p149 = scmp.eq.s32.totalorder %s19, 0
      %p150 = por %p148, %p149
      %p151 = scmp.ne.s32.totalorder %s137, %s138
      %p152 = scmp.eq.s32.totalorder %s20, 1
      %p153 = por %p151, %p152
      %p155 = scmp.ne.s32.totalorder %s138, %s154
      %p156 = scmp.eq.s32.totalorder %s20, 0
      %p157 = por %p155, %p156
      %p158 = scmp.le.s32.totalorder 1, %s14
      %p159 = scmp.lt.s32.totalorder %s14, 3
      %p160 = pnand %p158, %p159
      %p161 = pneg %p160
      // Predicated region
      $region9: #{model_forward.1} parent=5 // pred_check
        _
      $region10: #{model_forward.1} parent=5 // pred_check_branch
        %163 = sbr.rel (%p160) target = $region12
      $region11: #{model_forward.1} parent=5 // pred_region
        %s164 = ssub.s32 %s14, 1
        // Predicated region
        $region13: #{model_forward.1} parent=11 // pred_check
          %p165 = pneg %p61
        $region14: #{model_forward.1} parent=11 // pred_check_branch
          %167 = sbr.rel (%p165) target = $region16
        $region15: #{model_forward.1} parent=11 // pred_region
          _
        $region16: #{model_forward.1} parent=11 // pred_fallthru
          _
        // Predicated region
        $region17: #{model_forward.1} parent=11 // pred_check
          %p168 = pneg %p82
        $region18: #{model_forward.1} parent=11 // pred_check_branch
          %170 = sbr.rel (%p168) target = $region20
        $region19: #{model_forward.1} parent=11 // pred_region
          _
        $region20: #{model_forward.1} parent=11 // pred_fallthru
          _
        // Predicated region
        $region21: #{model_forward.1} parent=11 // pred_check
          %p171 = pneg %p103
        $region22: #{model_forward.1} parent=11 // pred_check_branch
          %173 = sbr.rel (%p171) target = $region24
        $region23: #{model_forward.1} parent=11 // pred_region
          _
        $region24: #{model_forward.1} parent=11 // pred_fallthru
          _
        // Predicated region
        $region25: #{model_forward.1} parent=11 // pred_check
          %p174 = pneg %p124
        $region26: #{model_forward.1} parent=11 // pred_check_branch
          %176 = sbr.rel (%p174) target = $region28
        $region27: #{model_forward.1} parent=11 // pred_region
          _
        $region28: #{model_forward.1} parent=11 // pred_fallthru
          _
      $region12: #{model_forward.1} parent=5 // pred_fallthru
        _
      %p177 = scmp.lt.s32.totalorder %s14, 2
      // Predicated region
      $region29: #{model_forward.1} parent=5 // pred_check
        %p178 = pneg %p177
      $region30: #{model_forward.1} parent=5 // pred_check_branch
        %180 = sbr.rel (%p178) target = $region32
      $region31: #{model_forward.1} parent=5 // pred_region
        // Predicated region
        $region33: #{model_forward.1} parent=31 // pred_check
          %p181 = pneg %p34
        $region34: #{model_forward.1} parent=31 // pred_check_branch
          %183 = sbr.rel (%p181) target = $region36
        $region35: #{model_forward.1} parent=31 // pred_region
          %s184 = sand.u32 %s24, 1
          %s185 = sand.u32 %s24, 1
          %s186 = smul.addr %s185, 40
          %s187 = scalar_lea.vmem [#allocation2], %s186
          %s188 = smul.u32 2, %s14
          %s189 = smul.addr %s188, 4
          %s190 = scalar_lea.vmem %s0, %s189
          // Predicated region
          $region37: #{model_forward.1} parent=35 // pred_check
            _
          $region38: #{model_forward.1} parent=35 // pred_check_branch
            %192 = sbr.rel (0) target = $region40
          $region39: #{model_forward.1} parent=35 // pred_region
            // Predicated region
            $region41: #{model_forward.1} parent=39 // pred_check
              _
            $region42: #{model_forward.1} parent=39 // pred_check_branch
              %194 = sbr.rel (0) target = $region44
            $region43: #{model_forward.1} parent=39 // pred_region
              // Predicated region
              $region56: #{model_forward.1} parent=43 // pred_check
                _
              $region57: #{model_forward.1} parent=43 // pred_check_branch
                %217 = sbr.rel (0) target = $region59
              $region58: #{model_forward.1} parent=43 // pred_region
                loop: start=0, step=1, limit=1
                $region60: #{model_forward.1} parent=58 // loop_pre_header
                  _
                $region61: #{model_forward.1} parent=58 // loop_header
                  %s219 = sphi 0, %s223
                  %p220 = scmp.ge.s32.totalorder %s219, 1
                  %s224 = sphi %s190, %s190
                  %s225 = sphi %s187, %s187
                $region62: #{model_forward.1} parent=58 // loop_header_branch
                  %222 = sbr.rel (%p220) target = $region66
                $region63: #{model_forward.1} parent=58 // loop_body
                  %v226 = vld [vmem:[%s224] sm:$0xff]
                  %227 = vst [vmem:[%s225] sm:$0xff] %v226
                  %v228 = vld [vmem:[%s224 + $0x10] sm:$0xff]
                  %229 = vst [vmem:[%s225 + $0x8] sm:$0xff] %v228
                  %v230 = vld [vmem:[%s224 + $0x20] sm:$0xff]
                  %231 = vst [vmem:[%s225 + $0x10] sm:$0xff] %v230
                  %v232 = vld [vmem:[%s224 + $0x30] sm:$0xff]
                  %233 = vst [vmem:[%s225 + $0x18] sm:$0xff] %v232
                  %v234 = vld [vmem:[%s224 + $0x40] sm:$0xff]
                  %235 = vst [vmem:[%s225 + $0x20] sm:$0xff] %v234
                $region64: #{model_forward.1} parent=58 // loop_footer
                  %s223 = sadd.s32 1, %s219
                $region65: #{model_forward.1} parent=58 // loop_footer_branch
                  %218 = sbr.rel target = $region61
                $region66: #{model_forward.1} parent=58 // loop_exit
                  _
              $region59: #{model_forward.1} parent=43 // pred_fallthru
                _
              // Predicated region
              $region67: #{model_forward.1} parent=43 // pred_check
                _
              $region68: #{model_forward.1} parent=43 // pred_check_branch
                %237 = sbr.rel target = $region70
              $region69: #{model_forward.1} parent=43 // pred_region
                _
              $region70: #{model_forward.1} parent=43 // pred_fallthru
                _
            $region44: #{model_forward.1} parent=39 // pred_fallthru
              _
            // Predicated region
            $region45: #{model_forward.1} parent=39 // pred_check
              _
            $region46: #{model_forward.1} parent=39 // pred_check_branch
              %196 = sbr.rel target = $region48
            $region47: #{model_forward.1} parent=39 // pred_region
              loop: start=0, step=1, limit=1
              $region49: #{model_forward.1} parent=47 // loop_pre_header
                _
              $region50: #{model_forward.1} parent=47 // loop_header
                %s199 = sphi 0, %s203
                %p200 = scmp.ge.s32.totalorder %s199, 1
                %s204 = sphi %s190, %s190
                %s205 = sphi %s187, %s187
              $region51: #{model_forward.1} parent=47 // loop_header_branch
                %202 = sbr.rel (%p200) target = $region55
              $region52: #{model_forward.1} parent=47 // loop_body
                %v206 = vld [vmem:[%s204] sm:$0xff]
                %207 = vst [vmem:[%s205] sm:$0xff] %v206
                %v208 = vld [vmem:[%s204 + $0x10] sm:$0xff]
                %209 = vst [vmem:[%s205 + $0x8] sm:$0xff] %v208
                %v210 = vld [vmem:[%s204 + $0x20] sm:$0xff]
                %211 = vst [vmem:[%s205 + $0x10] sm:$0xff] %v210
                %v212 = vld [vmem:[%s204 + $0x30] sm:$0xff]
                %213 = vst [vmem:[%s205 + $0x18] sm:$0xff] %v212
                %v214 = vld [vmem:[%s204 + $0x40] sm:$0xff]
                %215 = vst [vmem:[%s205 + $0x20] sm:$0xff] %v214
              $region53: #{model_forward.1} parent=47 // loop_footer
                %s203 = sadd.s32 1, %s199
              $region54: #{model_forward.1} parent=47 // loop_footer_branch
                %198 = sbr.rel target = $region50
              $region55: #{model_forward.1} parent=47 // loop_exit
                _
            $region48: #{model_forward.1} parent=39 // pred_fallthru
              _
          $region40: #{model_forward.1} parent=35 // pred_fallthru
            _
          %238 = vnop
        $region36: #{model_forward.1} parent=31 // pred_fallthru
          _
      $region32: #{model_forward.1} parent=5 // pred_fallthru
        _
      %p239 = scmp.le.s32.totalorder 1, %s14
      %p240 = scmp.lt.s32.totalorder %s14, 3
      %p241 = pnand %p239, %p240
      %p242 = pneg %p241
      // Predicated region
      $region71: #{model_forward.1} parent=5 // pred_check
        _
      $region72: #{model_forward.1} parent=5 // pred_check_branch
        %244 = sbr.rel (%p241) target = $region74
      $region73: #{model_forward.1} parent=5 // pred_region
        %s245 = ssub.s32 %s14, 1
        %s246 = sand.u32 %s27, 1
        %s247 = sand.u32 %s27, 1
        %s248 = smul.addr %s247, 40
        %s249 = scalar_lea.vmem [#allocation2], %s248
        // Predicated region
        $region75: #{model_forward.1} parent=73 // pred_check
          %p250 = pneg %p40
        $region76: #{model_forward.1} parent=73 // pred_check_branch
          %252 = sbr.rel (%p250) target = $region78
        $region77: #{model_forward.1} parent=73 // pred_region
          _
        $region78: #{model_forward.1} parent=73 // pred_fallthru
          _
        %s253 = sand.u32 %s27, 1
        %s254 = sand.u32 %s27, 1
        %s255 = smul.addr %s254, 40
        %s256 = scalar_lea.vmem [#allocation2], %s255
        %p257 = pneg %p40
        %p258 = pneg %p37
        %p259 = pneg %p61
        %p260 = pneg %p58
        %p261 = pneg %p82
        %p262 = pneg %p79
        %p263 = pneg %p103
        %p264 = pneg %p100
        %p265 = pneg %p124
        %p266 = pneg %p121
        %p267 = pneg %p150
        %p268 = pneg %p147
        %s269 = sand.u32 %s137, 1
        %s270 = scalar_lea.sflag [#allocation4], %s269
        %s271 = sand.u32 %s137, 1
        %s272 = scalar_lea.vmem [#allocation3], %s271
        %s273 = smul.u32 2, %s19
        %v275 = vld [vmem:[%s1] sm:$0xf]
        %v276 = vld [vmem:[%s249] sm:$0xff]
        %v277 = vld [vmem:[%s249 + $0x8] sm:$0xff]
        %v278 = vld [vmem:[%s249 + $0x10] sm:$0xff]
        %v279 = vld [vmem:[%s249 + $0x18] sm:$0xff]
        %v280 = vld [vmem:[%s249 + $0x20] sm:$0x33]
        %v281 = vld [vmem:[%s2] sm:$0xff]
        %283 = vset.pattern.permute.xlu0 0
        %284 = vperm.xlu0 %283, %v281
        %v285 = vpop.permute.xlu0 %284
        %v292 = vunpack.c.l.b16 %v276
        %v293 = vunpack.c.h.b16 %v276
        %v294 = vunpack.c.l.b16 %v277
        %v295 = vunpack.c.h.b16 %v277
        %v296 = vunpack.c.l.b16 %v278
        %v297 = vunpack.c.h.b16 %v278
        %v298 = vunpack.c.l.b16 %v279
        %v299 = vunpack.c.h.b16 %v279
        %v300 = vunpack.c.l.b16 %v280
        %v301 = vunpack.c.h.b16 %v280
        %v302 = vpack.c.b16 %v294, %v292
        %v303 = vpack.c.b16 %v295, %v293
        %v304 = vpack.c.b16 %v298, %v296
        %v305 = vpack.c.b16 %v299, %v297
        %v306 = vpack.c.b16 %v300, %v300
        %v307 = vpack.c.b16 %v301, %v301
        %vm312 = vcmask 293888
        %v314 = vsel %vm312, %v275, 0
        %vm316 = vcmask 1041408
        %v318 = vsel %vm316, %v306, 0
        %v321 = vsel %vm316, %v307, 0
        %323 = vmatprep.subr.bf16.mxu0 %v303
        %324 = vmatpush1.bf16.msra.mxu0 %v302
        %325 = vmatprep.subr.bf16.mxu0 %v305
        %326 = vmatpush1.bf16.msra.mxu0 %v304
        %327 = vmatprep.subr.bf16.mxu0 %v321
        %328 = vmatpush1.bf16.msra.mxu0 %v318
        %329 = vmatprep.subr.bf16.mxu0 0
        %330 = vmatpush1.bf16.msra.mxu0 0
        %331 = vmatprep.subr.bf16.mxu0 0
        %332 = vmatpush1.bf16.msra.mxu0 0
        %333 = vmatprep.subr.bf16.mxu0 0
        %334 = vmatpush1.bf16.msra.mxu0 0
        %335 = vmatprep.subr.bf16.mxu0 0
        %336 = vmatpush1.bf16.msra.mxu0 0
        %337 = vmatprep.subr.bf16.mxu0 0
        %338 = vmatpush1.bf16.msra.mxu0 0
        %339 = vmatprep.subr.bf16.mxu0 0
        %340 = vmatpush1.bf16.msra.mxu0 0
        %341 = vmatprep.subr.bf16.mxu0 0
        %342 = vmatpush1.bf16.msra.mxu0 0
        %343 = vmatprep.subr.bf16.mxu0 0
        %344 = vmatpush1.bf16.msra.mxu0 0
        %345 = vmatprep.subr.bf16.mxu0 0
        %346 = vmatpush1.bf16.msra.mxu0 0
        %347 = vmatprep.subr.bf16.mxu0 0
        %348 = vmatpush1.bf16.msra.mxu0 0
        %349 = vmatprep.subr.bf16.mxu0 0
        %350 = vmatpush1.bf16.msra.mxu0 0
        %351 = vmatprep.subr.bf16.mxu0 0
        %352 = vmatpush1.bf16.msra.mxu0 0
        %353 = vmatprep.subr.bf16.mxu0 0
        %354 = vmatpush1.bf16.msra.mxu0 0
        %355 = vmatprep.mubr.bf16.mxu0 0
        %356 = vmatmul.mubr.bf16.gmra.mrb[0].mxu0 %v314
        %v357 = vpop.f32.mrb[0].mxu0
        %v358 = vadd.f32 %v285, %v357
        %v359 = vpop.f32.mrb[0].mxu0
        %v360 = vadd.f32 %v285, %v359
        %v361 = vpop.f32.mrb[0].mxu0
        %v362 = vpop.f32.mrb[0].mxu0
        %363 = vdwg.mxu0
        %v364 = vmax.f32 %v358, 0.0
        %v365 = vmax.f32 %v360, 0.0
        %v366 = vadd.f32 %v364, %v365
        %367 = vadd.xlane.f32.xlu0 %v366
        %v368 = vpop.xlane.xlu0 %367
        %v369 = vmul.f32 %v368, 0.00390625
        %v370 = vld [vmem:[%s3] sm:$0xff]
        %v371 = vmul.f32 %v369, %v370
        %vm372 = vcmask 261120
        %v373 = vsel %vm372, %v371, 0.0
        %v374 = vrot.slane %v373, 4
        %v375 = vadd.f32 %v373, %v374
        %v376 = vrot.slane %v375, 2
        %v377 = vadd.f32 %v375, %v376
        %v378 = vrot.slane %v377, 1
        %v379 = vadd.f32 %v377, %v378
        %v380 = vld [vmem:[%s4] sm:$0x1]
        %v381 = vadd.f32 %v379, %v380
        %vm382 = vcmask 253952
        %v383 = vsel %vm382, %v381, -inf
        %384 = vmax.xlane.f32.xlu0 %v383
        %v385 = vpop.xlane.xlu0 %384
        %v386 = vsub.f32 %v381, %v385
        %v387 = vmul.f32 %v386, 1.442695
        %v388 = vpow.pop %v387
        %v389 = vsel %vm382, %v388, 0.0
        %390 = vadd.xlane.f32.xlu0 %v389
        %v391 = vpop.xlane.xlu0 %390
        %v392 = vrcp.pop %v391
        %v393 = vmul.f32 %v388, %v392
        %394 = vst.msk [vmem:[%s272] sm:$0x1] %vm382, %v393
        %s395 = sand.u32 %s137, 1
        %s396 = scalar_lea.sflag [#allocation4], %s395
        %s397 = sand.u32 %s137, 1
        %s398 = scalar_lea.vmem [#allocation3], %s397
        // Predicated region
        $region79: #{model_forward.1} parent=73 // pred_check
          %p399 = pneg %p147
        $region80: #{model_forward.1} parent=73 // pred_check_branch
          %401 = sbr.rel (%p399) target = $region82
        $region81: #{model_forward.1} parent=73 // pred_region
          %s403 = ssub.s32 16, 16
          %404 = vsyncadd %s396, %s403
          %s405 = smul.addr %s19, 16
          %s406 = scalar_lea.hbm %s5, %s405
          %s408 = sshll.u32 %s398, 4
          %s409 = int_to_ptr.vmem [resolvable:$true] %s408
          %411 = dma.vmem_to_hbm [thread:$0]  %s409, 16, %s406, %s396
        $region82: #{model_forward.1} parent=73 // pred_fallthru
          _
      $region74: #{model_forward.1} parent=5 // pred_fallthru
        _
      %p412 = scmp.le.s32.totalorder 2, %s14
      // Predicated region
      $region83: #{model_forward.1} parent=5 // pred_check
        %p413 = pneg %p412
      $region84: #{model_forward.1} parent=5 // pred_check_branch
        %415 = sbr.rel (%p413) target = $region86
      $region85: #{model_forward.1} parent=5 // pred_region
        %s416 = ssub.s32 %s14, 2
        // Predicated region
        $region87: #{model_forward.1} parent=85 // pred_check
          %p417 = pneg %p153
        $region88: #{model_forward.1} parent=85 // pred_check_branch
          %419 = sbr.rel (%p417) target = $region90
        $region89: #{model_forward.1} parent=85 // pred_region
          %s420 = sand.u32 %s138, 1
          %s421 = scalar_lea.sflag [#allocation4], %s420
          %s422 = sand.u32 %s138, 1
          %s423 = scalar_lea.vmem [#allocation3], %s422
          %424 = dma.done %s421, 16
        $region90: #{model_forward.1} parent=85 // pred_fallthru
          _
      $region86: #{model_forward.1} parent=5 // pred_fallthru
        _
    $region6: #{model_forward.1} parent=1 // loop_footer
      %s18 = sadd.s32 1, %s14
    $region7: #{model_forward.1} parent=1 // loop_footer_branch
      %13 = sbr.rel target = $region3
    $region8: #{model_forward.1} parent=1 // loop_exit
      _
    %425 = vsyncpa [#allocation4], 1
    %s426 = scalar_lea.sflag [#allocation4], 1
    %427 = vsyncpa %s426, 1

</llo_original>
